<compile_context>
chip_gen: v7x
topology: tpu7x:2x2x1
jax: 0.10.0
libtpu: 0.0.40
codegen_flags: <defaults>
</compile_context>

<pallas_src>
import functools

import numpy as np
import jax
import jax.numpy as jnp
from jax.experimental import pallas as pl
from jax.experimental.pallas import tpu as pltpu


def conv_out(h_in, padding, kernel_size, stride):
    return int((h_in + 2.0 * padding - (kernel_size - 1.0) - 1.0) / stride + 1.0)


def conv_out_shape(h_in, padding, kernel_size, stride):
    return tuple(conv_out(x, padding, kernel_size, stride) for x in h_in)


def _round_up(x, m):
    return ((x + m - 1) // m) * m


# ----------------------------- fused Pallas kernel ----------------------------- #

def _fused_obs_decoder_kernel(*refs, apply_elu):
    """Chain of GEMM + bias (+ ELU) stages, all VMEM-resident.

    refs = (x_ref, w0_ref, b0_ref, w1_ref, b1_ref, ..., out_ref)
    apply_elu[i] says whether stage i is followed by ELU.
    """
    x_ref, *wb_refs, o_ref = refs
    h = x_ref[...]                                            # (TB, K0) f32
    for i, elu in enumerate(apply_elu):
        w = wb_refs[2 * i][...]                               # (K, N) bf16 MXU operand
        b = wb_refs[2 * i + 1][...]                           # (1, N) f32
        h = jnp.dot(h.astype(w.dtype), w,
                    preferred_element_type=jnp.float32) + b   # f32 epilogue (v5e-safe)
        if elu:
            # ELU(alpha=1): exp(min(h,0)) - 1 (guaranteed EUP lowering; matches expm1
            # far below the bf16 matmul noise floor).
            h = jnp.where(h > 0.0, h, jnp.exp(jnp.minimum(h, 0.0)) - 1.0)
    o_ref[...] = h                                            # lane-dense (TB, N_pad) store


@functools.partial(jax.jit, static_argnames=("out_dim", "apply_elu", "tb_max"))
def _fused_decoder(x2d, weights, biases, *, out_dim, apply_elu, tb_max=512):
    """Run the whole decoder (folded Linear+conv1, conv2, conv3) in one pallas_call."""
    B, E = x2d.shape

    # Batch-row tile: multiple of 8 sublanes, capped at tb_max; pad the batch so the
    # grid divides evenly and slice the padding off afterwards.
    TB = min(tb_max, _round_up(B, 8))
    Bp = _round_up(B, TB)
    if Bp != B:
        x2d = jnp.pad(x2d, ((0, Bp - B), (0, 0)))
    grid = (Bp // TB,)

    in_specs = [pl.BlockSpec((TB, E), lambda i: (i, 0))]
    args = [x2d]
    for w, b in zip(weights, biases):
        kdim, ndim = w.shape
        # Weights/biases use a constant index_map: DMA'd once, then VMEM-resident.
        in_specs.append(pl.BlockSpec((kdim, ndim), lambda i: (0, 0)))
        in_specs.append(pl.BlockSpec((1, ndim), lambda i: (0, 0)))
        args += [w, b]
    out_specs = pl.BlockSpec((TB, out_dim), lambda i: (i, 0))

    flops = 2 * Bp * sum(int(w.shape[0]) * int(w.shape[1]) for w in weights)
    transcendentals = Bp * sum(int(w.shape[1]) for w, e in zip(weights, apply_elu) if e)
    bytes_accessed = (Bp * E * 4 + Bp * out_dim * 4
                      + sum(w.size * w.dtype.itemsize for w in weights)
                      + sum(b.size * b.dtype.itemsize for b in biases))

    # Explicit VMEM budget (v5e default scoped VMEM is 16 MiB; v7x physical 64 MiB).
    vmem_est = (2 * TB * (E + out_dim) * 4                                  # in/out (2x buffered)
                + 2 * sum(w.size * 2 + b.size * 4 for w, b in zip(weights, biases))
                + 8 * TB * sum(int(w.shape[1]) for w in weights))           # f32+bf16 temporaries
    vmem_limit = int(min(max(2 * vmem_est, 16 * 2 ** 20), 56 * 2 ** 20))

    kernel = functools.partial(_fused_obs_decoder_kernel, apply_elu=apply_elu)
    y = pl.pallas_call(
        kernel,
        out_shape=jax.ShapeDtypeStruct((Bp, out_dim), jnp.float32),
        grid=grid,
        in_specs=in_specs,
        out_specs=out_specs,
        compiler_params=pltpu.CompilerParams(
            dimension_semantics=("parallel",),        # batch tiles shard across TCs
            vmem_limit_bytes=vmem_limit,
        ),
        cost_estimate=pl.CostEstimate(
            flops=flops, transcendentals=transcendentals, bytes_accessed=bytes_accessed),
    )(*args)
    return y[:B]


# ------------------------------ weight folding --------------------------------- #

def _fold_conv_transpose(w_pt, b, hin, win):
    """Fold ConvTranspose2d(Cin->Cout, k, stride=1, pad=0) into a dense matrix acting on
    NCHW-flat activations:  out_flat = in_flat @ dense + bias_flat   (exact)."""
    w_pt = np.asarray(w_pt, dtype=np.float32)
    b = np.asarray(b, dtype=np.float32)
    cin, cout, k, _ = w_pt.shape
    hout, wout = hin + k - 1, win + k - 1
    dense = np.zeros((cin, hin, win, cout, hout, wout), dtype=np.float32)
    for kh in range(k):
        for kw in range(k):
            for hi in range(hin):
                for wi in range(win):
                    dense[:, hi, wi, :, hi + kh, wi + kw] = w_pt[:, :, kh, kw]
    dense = dense.reshape(cin * hin * win, cout * hout * wout)
    bias_flat = np.repeat(b, hout * wout)                      # NCHW-flat bias
    return dense, bias_flat


# ------------------------------ NumPy reference --------------------------------- #

def _elu_np(x):
    return np.where(x > 0.0, x, np.expm1(np.minimum(x, 0.0)))


def _conv_transpose_np(x, w, b):
    """Reference ConvTranspose2d(stride=1, pad=0); x NCHW, w (Cin, Cout, k, k)."""
    bsz, cin, hin, win = x.shape
    _, cout, k, _ = w.shape
    hout, wout = hin + k - 1, win + k - 1
    out = np.broadcast_to(b.reshape(1, cout, 1, 1),
                          (bsz, cout, hout, wout)).astype(np.float32).copy()
    for kh in range(k):
        for kw in range(k):
            out[:, :, kh:kh + hin, kw:kw + win] += np.einsum(
                "bchw,cd->bdhw", x, w[:, :, kh, kw])
    return out


# ---------------------------------- module -------------------------------------- #

class ObsDecoderPallas:
    """Mirror of dreamerv2 ObsDecoder (activation=ELU) with synthetic parameters.

    Forward pass runs as a single fused, batch-tiled Pallas kernel; only the mean of
    the output Normal distribution is produced.
    """

    def __init__(self, output_shape, embed_size, depth, kernel, key):
        c, h, w = output_shape
        d, k = depth, kernel
        conv1_shape = conv_out_shape((h, w), 0, k, 1)
        conv2_shape = conv_out_shape(conv1_shape, 0, k, 1)
        conv3_shape = conv_out_shape(conv2_shape, 0, k, 1)
        self.conv_shape = (4 * d, *conv3_shape)
        self.output_shape = output_shape
        self.out_dim = c * h * w
        self.out_dim_padded = _round_up(self.out_dim, 128)     # lane-dense kernel output
        p = int(np.prod(self.conv_shape))
        self.use_linear = (embed_size != p)

        keys = jax.random.split(key, 8)

        def init(kk, shape, scale=0.1):
            return np.asarray(jax.random.normal(kk, shape, dtype=jnp.float32)) * scale

        raw = {}
        if self.use_linear:
            # stored as (E, P) == torch Linear weight (P, E) transposed
            raw["w_lin"] = init(keys[0], (embed_size, p))
            raw["b_lin"] = init(keys[1], (p,))
        raw["w1"] = init(keys[2], (4 * d, 2 * d, k, k)); raw["b1"] = init(keys[3], (2 * d,))
        raw["w2"] = init(keys[4], (2 * d, d, k, k));     raw["b2"] = init(keys[5], (d,))
        raw["w3"] = init(keys[6], (d, c, k, k));         raw["b3"] = init(keys[7], (c,))
        self._raw = raw                                  # f32 copies for the reference path

        # Fold the three transposed convs into dense NCHW-flat matrices (exact).
        d1, bb1 = _fold_conv_transpose(raw["w1"], raw["b1"], *conv3_shape)
        d2, bb2 = _fold_conv_transpose(raw["w2"], raw["b2"], *conv2_shape)
        d3, bb3 = _fold_conv_transpose(raw["w3"], raw["b3"], *conv1_shape)

        # Fold the Linear (no activation between Linear and conv1) into conv1's matrix:
        #   x @ W_lin @ D1 + (b_lin @ D1 + bb1)   -- removes a full GEMM stage.
        if self.use_linear:
            d1 = raw["w_lin"].astype(np.float32) @ d1
            bb1 = raw["b_lin"].astype(np.float32) @ _fold_conv_transpose(
                raw["w1"], np.zeros_like(raw["b1"]), *conv3_shape)[0] + bb1

        # Zero-pad the final stage's N to a multiple of 128 so the output store is
        # unmasked / lane-dense; pad columns produce exact zeros and are sliced off.
        if self.out_dim_padded != self.out_dim:
            pad = self.out_dim_padded - self.out_dim
            d3 = np.concatenate([d3, np.zeros((d3.shape[0], pad), np.float32)], axis=1)
            bb3 = np.concatenate([bb3, np.zeros((pad,), np.float32)])

        mats = [(d1, bb1, True), (d2, bb2, True), (d3, bb3, False)]

        # bf16 MXU operands (weights); f32 biases for the f32 epilogue.
        self._weights = [jnp.asarray(m, dtype=jnp.bfloat16) for m, _, _ in mats]
        self._biases = [jnp.asarray(b, dtype=jnp.float32).reshape(1, -1) for _, b, _ in mats]
        self._apply_elu = tuple(a for _, _, a in mats)

    def __call__(self, x):
        batch_shape = x.shape[:-1]
        embed_size = x.shape[-1]
        B = int(np.prod(batch_shape))
        x2d = jnp.asarray(x, jnp.float32).reshape(B, embed_size)
        y = _fused_decoder(x2d, self._weights, self._biases,
                           out_dim=self.out_dim_padded, apply_elu=self._apply_elu)
        y = y[:, :self.out_dim]
        mean = y.reshape(*batch_shape, *self.output_shape)     # NCHW-flat -> (*batch,C,H,W)
        # TODO(synk): PyTorch returns td.Independent(td.Normal(mean, 1), 3); distribution
        # objects have no Pallas equivalent, so only the mean is returned (std is the constant 1).
        return mean

    def reference(self, x_np):
        """Pure-NumPy f32 reference (unfolded convs, explicit Linear) for correctness."""
        x_np = np.asarray(x_np, np.float32)
        batch_shape = x_np.shape[:-1]
        B = int(np.prod(batch_shape))
        h = x_np.reshape(B, x_np.shape[-1])
        if self.use_linear:
            h = h @ self._raw["w_lin"] + self._raw["b_lin"]
        h = h.reshape(B, *self.conv_shape)
        h = _elu_np(_conv_transpose_np(h, self._raw["w1"], self._raw["b1"]))
        h = _elu_np(_conv_transpose_np(h, self._raw["w2"], self._raw["b2"]))
        h = _conv_transpose_np(h, self._raw["w3"], self._raw["b3"])
        return h.reshape(*batch_shape, *self.output_shape)


if __name__ == "__main__":
    # output_shape=(3,10,10), k=3, d=4 -> conv_shape=(16,4,4), prod=256 != embed=32 -> Linear used.
    output_shape = (3, 10, 10)
    embed_size = 32
    decoder = ObsDecoderPallas(output_shape, embed_size, depth=4, kernel=3,
                               key=jax.random.PRNGKey(42))

    x = jax.random.normal(jax.random.PRNGKey(0), (2, 4, embed_size), dtype=jnp.float32)
    mean = jax.block_until_ready(decoder(x))

    assert mean.shape == (2, 4, *output_shape), mean.shape
    assert bool(jnp.all(jnp.isfinite(mean)))

    # Correctness vs an unfolded f32 NumPy reference (tolerance covers bf16 MXU inputs).
    ref = decoder.reference(np.asarray(x))
    np.testing.assert_allclose(np.asarray(mean), ref, rtol=1e-1, atol=5e-2)

    print("KERNEL_OK")
</pallas_src>

<mosaic_0001>
module attributes {stable_mosaic.version = 11 : i64} {
  func.func @_fused_obs_decoder_kernel(%arg0: i32, %arg1: memref<8x32xf32, #tpu.memory_space<vmem>>, %arg2: memref<32x288xbf16, #tpu.memory_space<vmem>>, %arg3: memref<1x288xf32, #tpu.memory_space<vmem>>, %arg4: memref<288x256xbf16, #tpu.memory_space<vmem>>, %arg5: memref<1x256xf32, #tpu.memory_space<vmem>>, %arg6: memref<256x384xbf16, #tpu.memory_space<vmem>>, %arg7: memref<1x384xf32, #tpu.memory_space<vmem>>, %arg8: memref<8x384xf32, #tpu.memory_space<vmem>>) attributes {dimension_semantics = [#tpu.dimension_semantics<parallel>], iteration_bounds = array<i64: 1>, scalar_prefetch = 0 : i64, scratch_operands = 0 : i64, tpu.core_type = #tpu.core_type<tc>, window_params = [{transform_indices = @transform_0, window_bounds = array<i64: 8, 32>}, {pipeline_mode = #tpu.pipeline_mode<synchronous>, transform_indices = @transform_1, window_bounds = array<i64: 32, 288>}, {pipeline_mode = #tpu.pipeline_mode<synchronous>, transform_indices = @transform_2, window_bounds = array<i64: 1, 288>}, {pipeline_mode = #tpu.pipeline_mode<synchronous>, transform_indices = @transform_3, window_bounds = array<i64: 288, 256>}, {pipeline_mode = #tpu.pipeline_mode<synchronous>, transform_indices = @transform_4, window_bounds = array<i64: 1, 256>}, {pipeline_mode = #tpu.pipeline_mode<synchronous>, transform_indices = @transform_5, window_bounds = array<i64: 256, 384>}, {pipeline_mode = #tpu.pipeline_mode<synchronous>, transform_indices = @transform_6, window_bounds = array<i64: 1, 384>}, {transform_indices = @transform_7, window_bounds = array<i64: 8, 384>}]} {
    %c0 = arith.constant 0 : index
    %c0_0 = arith.constant 0 : index
    %0 = vector.load %arg1[%c0, %c0_0] : memref<8x32xf32, #tpu.memory_space<vmem>>, vector<8x32xf32>
    %c0_1 = arith.constant 0 : index
    %c0_2 = arith.constant 0 : index
    %1 = vector.load %arg2[%c0_1, %c0_2] : memref<32x288xbf16, #tpu.memory_space<vmem>>, vector<32x288xbf16>
    %c0_3 = arith.constant 0 : index
    %c0_4 = arith.constant 0 : index
    %2 = vector.load %arg3[%c0_3, %c0_4] : memref<1x288xf32, #tpu.memory_space<vmem>>, vector<1x288xf32>
    %3 = arith.truncf %0 : vector<8x32xf32> to vector<8x32xbf16>
    %cst = arith.constant dense<0.000000e+00> : vector<8x288xf32>
    %4 = tpu.matmul %3, %1, %cst {dimension_numbers = #tpu.dot_dimension_numbers<[1], [0], [0], [1], [0, 0, 1, 1], [], []>} : vector<8x32xbf16>, vector<32x288xbf16>, vector<8x288xf32> -> vector<8x288xf32>
    %5 = vector.broadcast %2 : vector<1x288xf32> to vector<8x288xf32>
    %6 = arith.addf %4, %5 : vector<8x288xf32>
    %cst_5 = arith.constant 0.000000e+00 : f32
    %7 = vector.broadcast %cst_5 : f32 to vector<8x288xf32>
    %8 = arith.cmpf ogt, %6, %7 : vector<8x288xf32>
    %cst_6 = arith.constant 0.000000e+00 : f32
    %9 = vector.broadcast %cst_6 : f32 to vector<8x288xf32>
    %10 = arith.minimumf %6, %9 : vector<8x288xf32>
    %11 = math.exp %10 : vector<8x288xf32>
    %cst_7 = arith.constant 1.000000e+00 : f32
    %12 = vector.broadcast %cst_7 : f32 to vector<8x288xf32>
    %13 = arith.subf %11, %12 : vector<8x288xf32>
    %14 = arith.select %8, %6, %13 : vector<8x288xi1>, vector<8x288xf32>
    %c0_8 = arith.constant 0 : index
    %c0_9 = arith.constant 0 : index
    %15 = vector.load %arg4[%c0_8, %c0_9] : memref<288x256xbf16, #tpu.memory_space<vmem>>, vector<288x256xbf16>
    %c0_10 = arith.constant 0 : index
    %c0_11 = arith.constant 0 : index
    %16 = vector.load %arg5[%c0_10, %c0_11] : memref<1x256xf32, #tpu.memory_space<vmem>>, vector<1x256xf32>
    %17 = arith.truncf %14 : vector<8x288xf32> to vector<8x288xbf16>
    %cst_12 = arith.constant dense<0.000000e+00> : vector<8x256xf32>
    %18 = tpu.matmul %17, %15, %cst_12 {dimension_numbers = #tpu.dot_dimension_numbers<[1], [0], [0], [1], [0, 0, 1, 1], [], []>} : vector<8x288xbf16>, vector<288x256xbf16>, vector<8x256xf32> -> vector<8x256xf32>
    %19 = vector.broadcast %16 : vector<1x256xf32> to vector<8x256xf32>
    %20 = arith.addf %18, %19 : vector<8x256xf32>
    %cst_13 = arith.constant 0.000000e+00 : f32
    %21 = vector.broadcast %cst_13 : f32 to vector<8x256xf32>
    %22 = arith.cmpf ogt, %20, %21 : vector<8x256xf32>
    %cst_14 = arith.constant 0.000000e+00 : f32
    %23 = vector.broadcast %cst_14 : f32 to vector<8x256xf32>
    %24 = arith.minimumf %20, %23 : vector<8x256xf32>
    %25 = math.exp %24 : vector<8x256xf32>
    %cst_15 = arith.constant 1.000000e+00 : f32
    %26 = vector.broadcast %cst_15 : f32 to vector<8x256xf32>
    %27 = arith.subf %25, %26 : vector<8x256xf32>
    %28 = arith.select %22, %20, %27 : vector<8x256xi1>, vector<8x256xf32>
    %c0_16 = arith.constant 0 : index
    %c0_17 = arith.constant 0 : index
    %29 = vector.load %arg6[%c0_16, %c0_17] : memref<256x384xbf16, #tpu.memory_space<vmem>>, vector<256x384xbf16>
    %c0_18 = arith.constant 0 : index
    %c0_19 = arith.constant 0 : index
    %30 = vector.load %arg7[%c0_18, %c0_19] : memref<1x384xf32, #tpu.memory_space<vmem>>, vector<1x384xf32>
    %31 = arith.truncf %28 : vector<8x256xf32> to vector<8x256xbf16>
    %cst_20 = arith.constant dense<0.000000e+00> : vector<8x384xf32>
    %32 = tpu.matmul %31, %29, %cst_20 {dimension_numbers = #tpu.dot_dimension_numbers<[1], [0], [0], [1], [0, 0, 1, 1], [], []>} : vector<8x256xbf16>, vector<256x384xbf16>, vector<8x384xf32> -> vector<8x384xf32>
    %33 = vector.broadcast %30 : vector<1x384xf32> to vector<8x384xf32>
    %34 = arith.addf %32, %33 : vector<8x384xf32>
    %c0_21 = arith.constant 0 : index
    %c0_22 = arith.constant 0 : index
    %35 = vector.load %arg8[%c0_21, %c0_22] : memref<8x384xf32, #tpu.memory_space<vmem>>, vector<8x384xf32>
    tpu.vector_store %arg8[%c0_21, %c0_22], %34 {strides = array<i32>} : memref<8x384xf32, #tpu.memory_space<vmem>>, vector<8x384xf32>,
    return
  }
  func.func @transform_0(%arg0: i32) -> (i32, i32) {
    %c0_i32 = arith.constant 0 : i32
    %c0_i32_0 = arith.constant 0 : i32
    return %arg0, %c0_i32 : i32, i32
  }
  func.func @transform_1(%arg0: i32) -> (i32, i32) {
    %c0_i32 = arith.constant 0 : i32
    %c0_i32_0 = arith.constant 0 : i32
    %c0_i32_1 = arith.constant 0 : i32
    return %c0_i32, %c0_i32_0 : i32, i32
  }
  func.func @transform_2(%arg0: i32) -> (i32, i32) {
    %c0_i32 = arith.constant 0 : i32
    %c0_i32_0 = arith.constant 0 : i32
    %c0_i32_1 = arith.constant 0 : i32
    return %c0_i32, %c0_i32_0 : i32, i32
  }
  func.func @transform_3(%arg0: i32) -> (i32, i32) {
    %c0_i32 = arith.constant 0 : i32
    %c0_i32_0 = arith.constant 0 : i32
    %c0_i32_1 = arith.constant 0 : i32
    return %c0_i32, %c0_i32_0 : i32, i32
  }
  func.func @transform_4(%arg0: i32) -> (i32, i32) {
    %c0_i32 = arith.constant 0 : i32
    %c0_i32_0 = arith.constant 0 : i32
    %c0_i32_1 = arith.constant 0 : i32
    return %c0_i32, %c0_i32_0 : i32, i32
  }
  func.func @transform_5(%arg0: i32) -> (i32, i32) {
    %c0_i32 = arith.constant 0 : i32
    %c0_i32_0 = arith.constant 0 : i32
    %c0_i32_1 = arith.constant 0 : i32
    return %c0_i32, %c0_i32_0 : i32, i32
  }
  func.func @transform_6(%arg0: i32) -> (i32, i32) {
    %c0_i32 = arith.constant 0 : i32
    %c0_i32_0 = arith.constant 0 : i32
    %c0_i32_1 = arith.constant 0 : i32
    return %c0_i32, %c0_i32_0 : i32, i32
  }
  func.func @transform_7(%arg0: i32) -> (i32, i32) {
    %c0_i32 = arith.constant 0 : i32
    %c0_i32_0 = arith.constant 0 : i32
    return %arg0, %c0_i32 : i32, i32
  }
}

</mosaic_0001>

<llo_original>
// kernel: _fused_decoder.1
$region0: #{_fused_decoder.1}
  #allocation0 [shape = 'u32[]', space=smem, size = 0x4, offset = 0x4, fixed_abs, tag = 'smem constant byte address 0x4 - core index']
  #allocation1 [shape = 'u32[144,128]{1,0:T(1,128)}', space=vmem, size = 0x12000, scoped, tag = 'internal scratch']
  %s0 = inlined_call_operand.hbm [shape: f32[8,32], index: 0, kind: input, shape index: {}]
  %s1 = inlined_call_operand.hbm [shape: bf16[32,288], index: 1, kind: input, shape index: {}]
  %s2 = inlined_call_operand.vmem [shape: f32[1,288], index: 2, kind: input, shape index: {}]
  %s3 = inlined_call_operand.hbm [shape: bf16[288,256], index: 3, kind: input, shape index: {}]
  %s4 = inlined_call_operand.vmem [shape: f32[1,256], index: 4, kind: input, shape index: {}]
  %s5 = inlined_call_operand.hbm [shape: bf16[256,384], index: 5, kind: input, shape index: {}]
  %s6 = inlined_call_operand.vmem [shape: f32[1,384], index: 6, kind: input, shape index: {}]
  %s7 = inlined_call_operand.hbm [shape: f32[8,384], index: 7, kind: output, shape index: {}]
  %s8 = sld [smem:[#allocation0]]
  $region54: #{_fused_decoder.1} parent=0
    _
  %s10 = ssub.s32 1, %s8
  %s11 = scalar_select 0, %s10, %s8
  $region1: #{_fused_decoder.1} parent=0
    #allocation2 [shape = 'u8[4096]{0}', space=vmem, size = 0x1000, scoped, tag = 'input window, operand 0, single buffered']
    #allocation3 [shape = 's32[1]{0}', space=sflag, size = 0x4, scoped, tag = 'scoped memory for _fused_decoder.1']
    #allocation4 [shape = 's32[1]{0}', space=sflag, size = 0x4, scoped, tag = 'scoped memory for _fused_decoder.1']
    #allocation5 [shape = 'u8[24576]{0}', space=vmem, size = 0x6000, scoped, tag = 'input window, operand 1, single buffered']
    #allocation6 [shape = 's32[1]{0}', space=sflag, size = 0x4, scoped, tag = 'scoped memory for _fused_decoder.1']
    #allocation7 [shape = 'u8[147456]{0}', space=vmem, size = 0x24000, scoped, tag = 'input window, operand 3, single buffered']
    #allocation8 [shape = 'u8[196608]{0}', space=vmem, size = 0x30000, scoped, tag = 'input window, operand 5, single buffered']
    #allocation9 [shape = 's32[1]{0}', space=sflag, size = 0x4, scoped, tag = 'scoped memory for _fused_decoder.1']
    #allocation10 [shape = 'u8[12288]{0}', space=vmem, size = 0x3000, scoped, tag = 'output window, operand 0, single buffered']
    %12 = vsyncpa [#allocation3], 0
    %13 = vsyncpa [#allocation6], 0
    %14 = vsyncpa [#allocation9], 0
    %15 = vsyncpa [#allocation4], 0
    // Predicated region
    $region2: #{_fused_decoder.1} parent=1 // pred_check
      _
    $region3: #{_fused_decoder.1} parent=1 // pred_check_branch
      %17 = sbr.rel (0) target = $region5
    $region4: #{_fused_decoder.1} parent=1 // pred_region
      %s19 = ssub.s32 128, 128
      %20 = vsyncadd [#allocation3], %s19
      %s22 = sshll.u32 [#allocation2], 4
      %s23 = int_to_ptr.vmem [resolvable:$true] %s22
      %25 = dma.hbm_to_vmem [thread:$0]  %s0, 128, %s23, [#allocation3]
    $region5: #{_fused_decoder.1} parent=1 // pred_fallthru
      _
    // Predicated region
    $region6: #{_fused_decoder.1} parent=1 // pred_check
      _
    $region7: #{_fused_decoder.1} parent=1 // pred_check_branch
      %27 = sbr.rel (0) target = $region9
    $region8: #{_fused_decoder.1} parent=1 // pred_region
      %s29 = ssub.s32 768, 768
      %30 = vsyncadd [#allocation6], %s29
      %s31 = sshll.u32 [#allocation5], 4
      %s32 = int_to_ptr.vmem [resolvable:$true] %s31
      %37 = dma.hbm_to_vmem [thread:$0]  %s1, 768, %s32, [#allocation6], 192, 192, 12
    $region9: #{_fused_decoder.1} parent=1 // pred_fallthru
      _
    // Predicated region
    $region10: #{_fused_decoder.1} parent=1 // pred_check
      _
    $region11: #{_fused_decoder.1} parent=1 // pred_check_branch
      %39 = sbr.rel (0) target = $region13
    $region12: #{_fused_decoder.1} parent=1 // pred_region
      _
    $region13: #{_fused_decoder.1} parent=1 // pred_fallthru
      _
    // Predicated region
    $region14: #{_fused_decoder.1} parent=1 // pred_check
      _
    $region15: #{_fused_decoder.1} parent=1 // pred_check_branch
      %41 = sbr.rel (0) target = $region17
    $region16: #{_fused_decoder.1} parent=1 // pred_region
      %s43 = ssub.s32 4608, 4608
      %44 = vsyncadd [#allocation6], %s43
      %s45 = sshll.u32 [#allocation7], 4
      %s46 = int_to_ptr.vmem [resolvable:$true] %s45
      %51 = dma.hbm_to_vmem [thread:$0]  %s3, 4608, %s46, [#allocation6], 128, 128, 8
    $region17: #{_fused_decoder.1} parent=1 // pred_fallthru
      _
    // Predicated region
    $region18: #{_fused_decoder.1} parent=1 // pred_check
      _
    $region19: #{_fused_decoder.1} parent=1 // pred_check_branch
      %53 = sbr.rel (0) target = $region21
    $region20: #{_fused_decoder.1} parent=1 // pred_region
      _
    $region21: #{_fused_decoder.1} parent=1 // pred_fallthru
      _
    // Predicated region
    $region22: #{_fused_decoder.1} parent=1 // pred_check
      _
    $region23: #{_fused_decoder.1} parent=1 // pred_check_branch
      %55 = sbr.rel (0) target = $region25
    $region24: #{_fused_decoder.1} parent=1 // pred_region
      %s57 = ssub.s32 6144, 6144
      %58 = vsyncadd [#allocation9], %s57
      %s59 = sshll.u32 [#allocation8], 4
      %s60 = int_to_ptr.vmem [resolvable:$true] %s59
      %65 = dma.hbm_to_vmem [thread:$0]  %s5, 6144, %s60, [#allocation9], 192, 192, 12
    $region25: #{_fused_decoder.1} parent=1 // pred_fallthru
      _
    // Predicated region
    $region26: #{_fused_decoder.1} parent=1 // pred_check
      _
    $region27: #{_fused_decoder.1} parent=1 // pred_check_branch
      %67 = sbr.rel (0) target = $region29
    $region28: #{_fused_decoder.1} parent=1 // pred_region
      _
    $region29: #{_fused_decoder.1} parent=1 // pred_fallthru
      _
    // Predicated region
    $region30: #{_fused_decoder.1} parent=1 // pred_check
      _
    $region31: #{_fused_decoder.1} parent=1 // pred_check_branch
      %69 = sbr.rel (0) target = $region33
    $region32: #{_fused_decoder.1} parent=1 // pred_region
      %70 = dma.done [#allocation3], 128
    $region33: #{_fused_decoder.1} parent=1 // pred_fallthru
      _
    // Predicated region
    $region34: #{_fused_decoder.1} parent=1 // pred_check
      _
    $region35: #{_fused_decoder.1} parent=1 // pred_check_branch
      %72 = sbr.rel (0) target = $region37
    $region36: #{_fused_decoder.1} parent=1 // pred_region
      %73 = dma.done [#allocation6], 768
    $region37: #{_fused_decoder.1} parent=1 // pred_fallthru
      _
    // Predicated region
    $region38: #{_fused_decoder.1} parent=1 // pred_check
      _
    $region39: #{_fused_decoder.1} parent=1 // pred_check_branch
      %75 = sbr.rel (0) target = $region41
    $region40: #{_fused_decoder.1} parent=1 // pred_region
      %76 = dma.done [#allocation6], 4608
    $region41: #{_fused_decoder.1} parent=1 // pred_fallthru
      _
    // Predicated region
    $region42: #{_fused_decoder.1} parent=1 // pred_check
      _
    $region43: #{_fused_decoder.1} parent=1 // pred_check_branch
      %78 = sbr.rel (0) target = $region45
    $region44: #{_fused_decoder.1} parent=1 // pred_region
      %79 = dma.done [#allocation9], 6144
    $region45: #{_fused_decoder.1} parent=1 // pred_fallthru
      _
    %v81 = vld [vmem:[#allocation2] sm:$0xff]
    %v82 = vld [vmem:[#allocation5] sm:$0xff]
    %v83 = vld [vmem:[#allocation5 + $0x8] sm:$0xf]
    %v84 = vld [vmem:[#allocation5 + $0xc] sm:$0xff]
    %v85 = vld [vmem:[#allocation5 + $0x14] sm:$0xf]
    %v86 = vld [vmem:[#allocation5 + $0x18] sm:$0xff]
    %v87 = vld [vmem:[#allocation5 + $0x20] sm:$0xf]
    %v88 = vld [vmem:[#allocation5 + $0x24] sm:$0xff]
    %v89 = vld [vmem:[#allocation5 + $0x2c] sm:$0xf]
    %v90 = vld [vmem:[%s2] sm:$0x7]
    %v91 = vpack.c.bf16 %v81, %v81
    %v93 = vlaneseq
    %v94 = vshrl.u32 %v93, 7
    %v95 = vsub.s32 0, %v94
    %v96 = vrot.slane %v90, %v95
    %v97 = vlaneseq
    %v98 = vshrl.u32 %v97, 7
    %v99 = vsub.s32 1, %v98
    %v100 = vrot.slane %v90, %v99
    %v101 = vlaneseq
    %v102 = vshrl.u32 %v101, 7
    %v103 = vsub.s32 2, %v102
    %v104 = vrot.slane %v90, %v103
    %v116 = vunpack.c.l.b16 %v82
    %v117 = vunpack.c.h.b16 %v82
    %v118 = vunpack.c.l.b16 %v83
    %v119 = vunpack.c.l.b16 %v84
    %v120 = vunpack.c.h.b16 %v84
    %v121 = vunpack.c.l.b16 %v85
    %v122 = vunpack.c.l.b16 %v86
    %v123 = vunpack.c.h.b16 %v86
    %v124 = vunpack.c.l.b16 %v87
    %v125 = vunpack.c.l.b16 %v88
    %v126 = vunpack.c.h.b16 %v88
    %v127 = vunpack.c.l.b16 %v89
    %v128 = vpack.c.b16 %v119, %v116
    %v129 = vpack.c.b16 %v120, %v117
    %v130 = vpack.c.b16 %v121, %v118
    %v131 = vpack.c.b16 %v125, %v122
    %v132 = vpack.c.b16 %v126, %v123
    %v133 = vpack.c.b16 %v127, %v124
    %vm140 = vcmask 261120
    %v142 = vsel %vm140, %v91, 0
    %144 = vmatprep.subr.bf16.mxu0 %v129
    %145 = vmatpush1.bf16.msra.mxu0 %v128
    %146 = vmatprep.subr.bf16.mxu0 %v132
    %147 = vmatpush1.bf16.msra.mxu0 %v131
    %148 = vmatprep.subr.bf16.mxu0 0
    %149 = vmatpush1.bf16.msra.mxu0 0
    %150 = vmatprep.subr.bf16.mxu0 0
    %151 = vmatpush1.bf16.msra.mxu0 0
    %152 = vmatprep.subr.bf16.mxu0 0
    %153 = vmatpush1.bf16.msra.mxu0 0
    %154 = vmatprep.subr.bf16.mxu0 0
    %155 = vmatpush1.bf16.msra.mxu0 0
    %156 = vmatprep.subr.bf16.mxu0 0
    %157 = vmatpush1.bf16.msra.mxu0 0
    %158 = vmatprep.subr.bf16.mxu0 0
    %159 = vmatpush1.bf16.msra.mxu0 0
    %160 = vmatprep.subr.bf16.mxu0 0
    %161 = vmatpush1.bf16.msra.mxu0 0
    %162 = vmatprep.subr.bf16.mxu0 0
    %163 = vmatpush1.bf16.msra.mxu0 0
    %164 = vmatprep.subr.bf16.mxu0 0
    %165 = vmatpush1.bf16.msra.mxu0 0
    %166 = vmatprep.subr.bf16.mxu0 0
    %167 = vmatpush1.bf16.msra.mxu0 0
    %168 = vmatprep.subr.bf16.mxu0 0
    %169 = vmatpush1.bf16.msra.mxu0 0
    %170 = vmatprep.subr.bf16.mxu0 0
    %171 = vmatpush1.bf16.msra.mxu0 0
    %172 = vmatprep.subr.bf16.mxu0 0
    %173 = vmatpush1.bf16.msra.mxu0 0
    %174 = vmatprep.subr.bf16.mxu0 0
    %175 = vmatpush1.bf16.msra.mxu0 0
    %176 = vmatprep.mubr.bf16.mxu0 0
    %177 = vmatmul.mubr.bf16.gmra.mrb[0].mxu0 %v142
    %v178 = vpop.f32.mrb[0].mxu0
    %v179 = vadd.f32 %v96, %v178
    %v180 = vpop.f32.mrb[0].mxu0
    %v181 = vadd.f32 %v100, %v180
    %v182 = vpop.f32.mrb[0].mxu0
    %v183 = vpop.f32.mrb[0].mxu0
    %184 = vdwg.mxu0
    %185 = vmatprep.subr.bf16.mxu0 0
    %186 = vmatpush1.bf16.msra.mxu0 %v130
    %187 = vmatprep.subr.bf16.mxu0 0
    %188 = vmatpush1.bf16.msra.mxu0 %v133
    %189 = vmatprep.subr.bf16.mxu0 0
    %190 = vmatpush1.bf16.msra.mxu0 0
    %191 = vmatprep.subr.bf16.mxu0 0
    %192 = vmatpush1.bf16.msra.mxu0 0
    %193 = vmatprep.subr.bf16.mxu0 0
    %194 = vmatpush1.bf16.msra.mxu0 0
    %195 = vmatprep.subr.bf16.mxu0 0
    %196 = vmatpush1.bf16.msra.mxu0 0
    %197 = vmatprep.subr.bf16.mxu0 0
    %198 = vmatpush1.bf16.msra.mxu0 0
    %199 = vmatprep.subr.bf16.mxu0 0
    %200 = vmatpush1.bf16.msra.mxu0 0
    %201 = vmatprep.subr.bf16.mxu0 0
    %202 = vmatpush1.bf16.msra.mxu0 0
    %203 = vmatprep.subr.bf16.mxu0 0
    %204 = vmatpush1.bf16.msra.mxu0 0
    %205 = vmatprep.subr.bf16.mxu0 0
    %206 = vmatpush1.bf16.msra.mxu0 0
    %207 = vmatprep.subr.bf16.mxu0 0
    %208 = vmatpush1.bf16.msra.mxu0 0
    %209 = vmatprep.subr.bf16.mxu0 0
    %210 = vmatpush1.bf16.msra.mxu0 0
    %211 = vmatprep.subr.bf16.mxu0 0
    %212 = vmatpush1.bf16.msra.mxu0 0
    %213 = vmatprep.subr.bf16.mxu0 0
    %214 = vmatpush1.bf16.msra.mxu0 0
    %215 = vmatprep.subr.bf16.mxu0 0
    %216 = vmatpush1.bf16.msra.mxu0 0
    %217 = vmatprep.mubr.bf16.mxu0 0
    %218 = vmatmul.mubr.bf16.gmra.mrb[0].mxu0 %v142
    %v219 = vpop.f32.mrb[0].mxu0
    %v220 = vadd.f32 %v104, %v219
    %v221 = vpop.f32.mrb[0].mxu0
    %v222 = vpop.f32.mrb[0].mxu0
    %v223 = vpop.f32.mrb[0].mxu0
    %224 = vdwg.mxu0
    %vm225 = vcmp.gt.f32.partialorder %v179, 0.0
    %vm226 = vcmp.gt.f32.partialorder %v181, 0.0
    %vm227 = vcmp.gt.f32.partialorder %v220, 0.0
    %v228 = vmin.f32 %v179, 0.0
    %v229 = vmin.f32 %v181, 0.0
    %v230 = vmin.f32 %v220, 0.0
    %v231 = vmul.f32 %v228, 1.442695
    %v232 = vpow.pop %v231
    %v233 = vmul.f32 %v229, 1.442695
    %v234 = vpow.pop %v233
    %v235 = vmul.f32 %v230, 1.442695
    %v236 = vpow.pop %v235
    %v237 = vsub.f32 %v232, 1.0
    %v238 = vsub.f32 %v234, 1.0
    %v239 = vsub.f32 %v236, 1.0
    %v240 = vsel %vm225, %v179, %v237
    %v241 = vsel %vm226, %v181, %v238
    %v242 = vsel %vm227, %v220, %v239
    %v243 = vld [vmem:[#allocation7] sm:$0xff]
    %v244 = vld [vmem:[#allocation7 + $0x8] sm:$0xff]
    %v245 = vld [vmem:[#allocation7 + $0x10] sm:$0xff]
    %v246 = vld [vmem:[#allocation7 + $0x18] sm:$0xff]
    %v247 = vld [vmem:[#allocation7 + $0x20] sm:$0xff]
    %v248 = vld [vmem:[#allocation7 + $0x28] sm:$0xff]
    %v249 = vld [vmem:[#allocation7 + $0x30] sm:$0xff]
    %v250 = vld [vmem:[#allocation7 + $0x38] sm:$0xff]
    %v251 = vld [vmem:[#allocation7 + $0x40] sm:$0xff]
    %v252 = vld [vmem:[#allocation7 + $0x48] sm:$0xff]
    %v253 = vld [vmem:[#allocation7 + $0x50] sm:$0xff]
    %v254 = vld [vmem:[#allocation7 + $0x58] sm:$0xff]
    %v255 = vld [vmem:[#allocation7 + $0x60] sm:$0xff]
    %v256 = vld [vmem:[#allocation7 + $0x68] sm:$0xff]
    %v257 = vld [vmem:[#allocation7 + $0x70] sm:$0xff]
    %v258 = vld [vmem:[#allocation7 + $0x78] sm:$0xff]
    %v259 = vld [vmem:[#allocation7 + $0x80] sm:$0xff]
    %v260 = vld [vmem:[#allocation7 + $0x88] sm:$0xff]
    %v261 = vld [vmem:[#allocation7 + $0x90] sm:$0xff]
    %v262 = vld [vmem:[#allocation7 + $0x98] sm:$0xff]
    %v263 = vld [vmem:[#allocation7 + $0xa0] sm:$0xff]
    %v264 = vld [vmem:[#allocation7 + $0xa8] sm:$0xff]
    %v265 = vld [vmem:[#allocation7 + $0xb0] sm:$0xff]
    %v266 = vld [vmem:[#allocation7 + $0xb8] sm:$0xff]
    %v267 = vld [vmem:[#allocation7 + $0xc0] sm:$0xff]
    %v268 = vld [vmem:[#allocation7 + $0xc8] sm:$0xff]
    %v269 = vld [vmem:[#allocation7 + $0xd0] sm:$0xff]
    %v270 = vld [vmem:[#allocation7 + $0xd8] sm:$0xff]
    %v271 = vld [vmem:[#allocation7 + $0xe0] sm:$0xff]
    %v272 = vld [vmem:[#allocation7 + $0xe8] sm:$0xff]
    %v273 = vld [vmem:[#allocation7 + $0xf0] sm:$0xff]
    %v274 = vld [vmem:[#allocation7 + $0xf8] sm:$0xff]
    %v275 = vld [vmem:[#allocation7 + $0x100] sm:$0xff]
    %v276 = vld [vmem:[#allocation7 + $0x108] sm:$0xff]
    %v277 = vld [vmem:[#allocation7 + $0x110] sm:$0xff]
    %v278 = vld [vmem:[#allocation7 + $0x118] sm:$0xff]
    %v279 = vld [vmem:[%s4] sm:$0x3]
    %v280 = vpack.c.bf16 %v240, %v240
    %v281 = vpack.c.bf16 %v241, %v241
    %v282 = vpack.c.bf16 %v242, %v242
    %v284 = vlaneseq
    %v285 = vshrl.u32 %v284, 7
    %v286 = vsub.s32 0, %v285
    %v287 = vrot.slane %v279, %v286
    %v288 = vlaneseq
    %v289 = vshrl.u32 %v288, 7
    %v290 = vsub.s32 1, %v289
    %v291 = vrot.slane %v279, %v290
    %v330 = vunpack.c.l.b16 %v243
    %v331 = vunpack.c.h.b16 %v243
    %v332 = vunpack.c.l.b16 %v244
    %v333 = vunpack.c.h.b16 %v244
    %v334 = vunpack.c.l.b16 %v245
    %v335 = vunpack.c.h.b16 %v245
    %v336 = vunpack.c.l.b16 %v246
    %v337 = vunpack.c.h.b16 %v246
    %v338 = vunpack.c.l.b16 %v247
    %v339 = vunpack.c.h.b16 %v247
    %v340 = vunpack.c.l.b16 %v248
    %v341 = vunpack.c.h.b16 %v248
    %v342 = vunpack.c.l.b16 %v249
    %v343 = vunpack.c.h.b16 %v249
    %v344 = vunpack.c.l.b16 %v250
    %v345 = vunpack.c.h.b16 %v250
    %v346 = vunpack.c.l.b16 %v251
    %v347 = vunpack.c.h.b16 %v251
    %v348 = vunpack.c.l.b16 %v252
    %v349 = vunpack.c.h.b16 %v252
    %v350 = vunpack.c.l.b16 %v253
    %v351 = vunpack.c.h.b16 %v253
    %v352 = vunpack.c.l.b16 %v254
    %v353 = vunpack.c.h.b16 %v254
    %v354 = vunpack.c.l.b16 %v255
    %v355 = vunpack.c.h.b16 %v255
    %v356 = vunpack.c.l.b16 %v256
    %v357 = vunpack.c.h.b16 %v256
    %v358 = vunpack.c.l.b16 %v257
    %v359 = vunpack.c.h.b16 %v257
    %v360 = vunpack.c.l.b16 %v258
    %v361 = vunpack.c.h.b16 %v258
    %v362 = vunpack.c.l.b16 %v259
    %v363 = vunpack.c.h.b16 %v259
    %v364 = vunpack.c.l.b16 %v260
    %v365 = vunpack.c.h.b16 %v260
    %v366 = vunpack.c.l.b16 %v261
    %v367 = vunpack.c.h.b16 %v261
    %v368 = vunpack.c.l.b16 %v262
    %v369 = vunpack.c.h.b16 %v262
    %v370 = vunpack.c.l.b16 %v263
    %v371 = vunpack.c.h.b16 %v263
    %v372 = vunpack.c.l.b16 %v264
    %v373 = vunpack.c.h.b16 %v264
    %v374 = vunpack.c.l.b16 %v265
    %v375 = vunpack.c.h.b16 %v265
    %v376 = vunpack.c.l.b16 %v266
    %v377 = vunpack.c.h.b16 %v266
    %v378 = vunpack.c.l.b16 %v267
    %v379 = vunpack.c.h.b16 %v267
    %v380 = vunpack.c.l.b16 %v268
    %v381 = vunpack.c.h.b16 %v268
    %v382 = vunpack.c.l.b16 %v269
    %v383 = vunpack.c.h.b16 %v269
    %v384 = vunpack.c.l.b16 %v270
    %v385 = vunpack.c.h.b16 %v270
    %v386 = vunpack.c.l.b16 %v271
    %v387 = vunpack.c.h.b16 %v271
    %v388 = vunpack.c.l.b16 %v272
    %v389 = vunpack.c.h.b16 %v272
    %v390 = vunpack.c.l.b16 %v273
    %v391 = vunpack.c.h.b16 %v273
    %v392 = vunpack.c.l.b16 %v274
    %v393 = vunpack.c.h.b16 %v274
    %v394 = vunpack.c.l.b16 %v275
    %v395 = vunpack.c.h.b16 %v275
    %v396 = vunpack.c.l.b16 %v276
    %v397 = vunpack.c.h.b16 %v276
    %v398 = vunpack.c.l.b16 %v277
    %v399 = vunpack.c.h.b16 %v277
    %v400 = vunpack.c.l.b16 %v278
    %v401 = vunpack.c.h.b16 %v278
    %v402 = vpack.c.b16 %v332, %v330
    %v403 = vpack.c.b16 %v333, %v331
    %v404 = vpack.c.b16 %v336, %v334
    %v405 = vpack.c.b16 %v337, %v335
    %v406 = vpack.c.b16 %v340, %v338
    %v407 = vpack.c.b16 %v341, %v339
    %v408 = vpack.c.b16 %v344, %v342
    %v409 = vpack.c.b16 %v345, %v343
    %v410 = vpack.c.b16 %v348, %v346
    %v411 = vpack.c.b16 %v349, %v347
    %v412 = vpack.c.b16 %v352, %v350
    %v413 = vpack.c.b16 %v353, %v351
    %v414 = vpack.c.b16 %v356, %v354
    %v415 = vpack.c.b16 %v357, %v355
    %v416 = vpack.c.b16 %v360, %v358
    %v417 = vpack.c.b16 %v361, %v359
    %v418 = vpack.c.b16 %v364, %v362
    %v419 = vpack.c.b16 %v365, %v363
    %v420 = vpack.c.b16 %v368, %v366
    %v421 = vpack.c.b16 %v369, %v367
    %v422 = vpack.c.b16 %v372, %v370
    %v423 = vpack.c.b16 %v373, %v371
    %v424 = vpack.c.b16 %v376, %v374
    %v425 = vpack.c.b16 %v377, %v375
    %v426 = vpack.c.b16 %v380, %v378
    %v427 = vpack.c.b16 %v381, %v379
    %v428 = vpack.c.b16 %v384, %v382
    %v429 = vpack.c.b16 %v385, %v383
    %v430 = vpack.c.b16 %v388, %v386
    %v431 = vpack.c.b16 %v389, %v387
    %v432 = vpack.c.b16 %v392, %v390
    %v433 = vpack.c.b16 %v393, %v391
    %v434 = vpack.c.b16 %v396, %v394
    %v435 = vpack.c.b16 %v397, %v395
    %v436 = vpack.c.b16 %v400, %v398
    %v437 = vpack.c.b16 %v401, %v399
    %v475 = vsel %vm140, %v282, 0
    %477 = vmatprep.subr.bf16.mxu0 %v403
    %478 = vmatpush1.bf16.msra.mxu0 %v402
    %479 = vmatprep.subr.bf16.mxu0 %v405
    %480 = vmatpush1.bf16.msra.mxu0 %v404
    %481 = vmatprep.subr.bf16.mxu0 %v407
    %482 = vmatpush1.bf16.msra.mxu0 %v406
    %483 = vmatprep.subr.bf16.mxu0 %v409
    %484 = vmatpush1.bf16.msra.mxu0 %v408
    %485 = vmatprep.subr.bf16.mxu0 %v411
    %486 = vmatpush1.bf16.msra.mxu0 %v410
    %487 = vmatprep.subr.bf16.mxu0 %v413
    %488 = vmatpush1.bf16.msra.mxu0 %v412
    %489 = vmatprep.subr.bf16.mxu0 %v415
    %490 = vmatpush1.bf16.msra.mxu0 %v414
    %491 = vmatprep.subr.bf16.mxu0 %v417
    %492 = vmatpush1.bf16.msra.mxu0 %v416
    %493 = vmatprep.subr.bf16.mxu0 %v419
    %494 = vmatpush1.bf16.msra.mxu0 %v418
    %495 = vmatprep.subr.bf16.mxu0 %v421
    %496 = vmatpush1.bf16.msra.mxu0 %v420
    %497 = vmatprep.subr.bf16.mxu0 %v423
    %498 = vmatpush1.bf16.msra.mxu0 %v422
    %499 = vmatprep.subr.bf16.mxu0 %v425
    %500 = vmatpush1.bf16.msra.mxu0 %v424
    %501 = vmatprep.subr.bf16.mxu0 %v427
    %502 = vmatpush1.bf16.msra.mxu0 %v426
    %503 = vmatprep.subr.bf16.mxu0 %v429
    %504 = vmatpush1.bf16.msra.mxu0 %v428
    %505 = vmatprep.subr.bf16.mxu0 %v431
    %506 = vmatpush1.bf16.msra.mxu0 %v430
    %507 = vmatprep.subr.bf16.mxu0 %v433
    %508 = vmatpush1.bf16.msra.mxu0 %v432
    %509 = vmatprep.mubr.bf16.mxu0 %v281
    %510 = vmatmul.mubr.bf16.gmra.mrb[0].mxu0 %v280
    %v511 = vpop.f32.mrb[0].mxu0
    %v512 = vadd.f32 %v287, %v511
    %v513 = vpop.f32.mrb[0].mxu0
    %v514 = vadd.f32 %v291, %v513
    %v515 = vpop.f32.mrb[0].mxu0
    %v516 = vpop.f32.mrb[0].mxu0
    %517 = vdwg.mxu0
    %518 = vmatprep.subr.bf16.mxu0 %v435
    %519 = vmatpush1.bf16.msra.mxu0 %v434
    %520 = vmatprep.subr.bf16.mxu0 %v437
    %521 = vmatpush1.bf16.msra.mxu0 %v436
    %522 = vmatprep.subr.bf16.mxu0 0
    %523 = vmatpush1.bf16.msra.mxu0 0
    %524 = vmatprep.subr.bf16.mxu0 0
    %525 = vmatpush1.bf16.msra.mxu0 0
    %526 = vmatprep.subr.bf16.mxu0 0
    %527 = vmatpush1.bf16.msra.mxu0 0
    %528 = vmatprep.subr.bf16.mxu0 0
    %529 = vmatpush1.bf16.msra.mxu0 0
    %530 = vmatprep.subr.bf16.mxu0 0
    %531 = vmatpush1.bf16.msra.mxu0 0
    %532 = vmatprep.subr.bf16.mxu0 0
    %533 = vmatpush1.bf16.msra.mxu0 0
    %534 = vmatprep.subr.bf16.mxu0 0
    %535 = vmatpush1.bf16.msra.mxu0 0
    %536 = vmatprep.subr.bf16.mxu0 0
    %537 = vmatpush1.bf16.msra.mxu0 0
    %538 = vmatprep.subr.bf16.mxu0 0
    %539 = vmatpush1.bf16.msra.mxu0 0
    %540 = vmatprep.subr.bf16.mxu0 0
    %541 = vmatpush1.bf16.msra.mxu0 0
    %542 = vmatprep.subr.bf16.mxu0 0
    %543 = vmatpush1.bf16.msra.mxu0 0
    %544 = vmatprep.subr.bf16.mxu0 0
    %545 = vmatpush1.bf16.msra.mxu0 0
    %546 = vmatprep.subr.bf16.mxu0 0
    %547 = vmatpush1.bf16.msra.mxu0 0
    %548 = vmatprep.subr.bf16.mxu0 0
    %549 = vmatpush1.bf16.msra.mxu0 0
    %550 = vmatprep.mubr.bf16.mxu0 0
    %551 = vmatmul.mubr.bf16.gmra.mrb[0].mxu0 %v475
    %v552 = vpop.f32.mrb[0].mxu0
    %v553 = vadd.f32 %v512, %v552
    %v554 = vpop.f32.mrb[0].mxu0
    %v555 = vadd.f32 %v514, %v554
    %v556 = vpop.f32.mrb[0].mxu0
    %v557 = vpop.f32.mrb[0].mxu0
    %558 = vdwg.mxu0
    %vm559 = vcmp.gt.f32.partialorder %v553, 0.0
    %vm560 = vcmp.gt.f32.partialorder %v555, 0.0
    %v561 = vmin.f32 %v553, 0.0
    %v562 = vmin.f32 %v555, 0.0
    %v563 = vmul.f32 %v561, 1.442695
    %v564 = vpow.pop %v563
    %v565 = vmul.f32 %v562, 1.442695
    %v566 = vpow.pop %v565
    %v567 = vsub.f32 %v564, 1.0
    %v568 = vsub.f32 %v566, 1.0
    %v569 = vsel %vm559, %v553, %v567
    %v570 = vsel %vm560, %v555, %v568
    %v571 = vld [vmem:[#allocation8] sm:$0xff]
    %v572 = vld [vmem:[#allocation8 + $0x8] sm:$0xf]
    %v573 = vld [vmem:[#allocation8 + $0xc] sm:$0xff]
    %v574 = vld [vmem:[#allocation8 + $0x14] sm:$0xf]
    %v575 = vld [vmem:[#allocation8 + $0x18] sm:$0xff]
    %v576 = vld [vmem:[#allocation8 + $0x20] sm:$0xf]
    %v577 = vld [vmem:[#allocation8 + $0x24] sm:$0xff]
    %v578 = vld [vmem:[#allocation8 + $0x2c] sm:$0xf]
    %v579 = vld [vmem:[#allocation8 + $0x30] sm:$0xff]
    %v580 = vld [vmem:[#allocation8 + $0x38] sm:$0xf]
    %v581 = vld [vmem:[#allocation8 + $0x3c] sm:$0xff]
    %v582 = vld [vmem:[#allocation8 + $0x44] sm:$0xf]
    %v583 = vld [vmem:[#allocation8 + $0x48] sm:$0xff]
    %v584 = vld [vmem:[#allocation8 + $0x50] sm:$0xf]
    %v585 = vld [vmem:[#allocation8 + $0x54] sm:$0xff]
    %v586 = vld [vmem:[#allocation8 + $0x5c] sm:$0xf]
    %v587 = vld [vmem:[#allocation8 + $0x60] sm:$0xff]
    %v588 = vld [vmem:[#allocation8 + $0x68] sm:$0xf]
    %v589 = vld [vmem:[#allocation8 + $0x6c] sm:$0xff]
    %v590 = vld [vmem:[#allocation8 + $0x74] sm:$0xf]
    %v591 = vld [vmem:[#allocation8 + $0x78] sm:$0xff]
    %v592 = vld [vmem:[#allocation8 + $0x80] sm:$0xf]
    %v593 = vld [vmem:[#allocation8 + $0x84] sm:$0xff]
    %v594 = vld [vmem:[#allocation8 + $0x8c] sm:$0xf]
    %v595 = vld [vmem:[#allocation8 + $0x90] sm:$0xff]
    %v596 = vld [vmem:[#allocation8 + $0x98] sm:$0xf]
    %v597 = vld [vmem:[#allocation8 + $0x9c] sm:$0xff]
    %v598 = vld [vmem:[#allocation8 + $0xa4] sm:$0xf]
    %v599 = vld [vmem:[#allocation8 + $0xa8] sm:$0xff]
    %v600 = vld [vmem:[#allocation8 + $0xb0] sm:$0xf]
    %v601 = vld [vmem:[#allocation8 + $0xb4] sm:$0xff]
    %v602 = vld [vmem:[#allocation8 + $0xbc] sm:$0xf]
    %v603 = vld [vmem:[#allocation8 + $0xc0] sm:$0xff]
    %v604 = vld [vmem:[#allocation8 + $0xc8] sm:$0xf]
    %v605 = vld [vmem:[#allocation8 + $0xcc] sm:$0xff]
    %v606 = vld [vmem:[#allocation8 + $0xd4] sm:$0xf]
    %v607 = vld [vmem:[#allocation8 + $0xd8] sm:$0xff]
    %v608 = vld [vmem:[#allocation8 + $0xe0] sm:$0xf]
    %v609 = vld [vmem:[#allocation8 + $0xe4] sm:$0xff]
    %v610 = vld [vmem:[#allocation8 + $0xec] sm:$0xf]
    %v611 = vld [vmem:[#allocation8 + $0xf0] sm:$0xff]
    %v612 = vld [vmem:[#allocation8 + $0xf8] sm:$0xf]
    %v613 = vld [vmem:[#allocation8 + $0xfc] sm:$0xff]
    %v614 = vld [vmem:[#allocation8 + $0x104] sm:$0xf]
    %v615 = vld [vmem:[#allocation8 + $0x108] sm:$0xff]
    %v616 = vld [vmem:[#allocation8 + $0x110] sm:$0xf]
    %v617 = vld [vmem:[#allocation8 + $0x114] sm:$0xff]
    %v618 = vld [vmem:[#allocation8 + $0x11c] sm:$0xf]
    %v619 = vld [vmem:[#allocation8 + $0x120] sm:$0xff]
    %v620 = vld [vmem:[#allocation8 + $0x128] sm:$0xf]
    %v621 = vld [vmem:[#allocation8 + $0x12c] sm:$0xff]
    %v622 = vld [vmem:[#allocation8 + $0x134] sm:$0xf]
    %v623 = vld [vmem:[#allocation8 + $0x138] sm:$0xff]
    %v624 = vld [vmem:[#allocation8 + $0x140] sm:$0xf]
    %v625 = vld [vmem:[#allocation8 + $0x144] sm:$0xff]
    %v626 = vld [vmem:[#allocation8 + $0x14c] sm:$0xf]
    %v627 = vld [vmem:[#allocation8 + $0x150] sm:$0xff]
    %v628 = vld [vmem:[#allocation8 + $0x158] sm:$0xf]
    %v629 = vld [vmem:[#allocation8 + $0x15c] sm:$0xff]
    %v630 = vld [vmem:[#allocation8 + $0x164] sm:$0xf]
    %v631 = vld [vmem:[#allocation8 + $0x168] sm:$0xff]
    %v632 = vld [vmem:[#allocation8 + $0x170] sm:$0xf]
    %v633 = vld [vmem:[#allocation8 + $0x174] sm:$0xff]
    %v634 = vld [vmem:[#allocation8 + $0x17c] sm:$0xf]
    %v635 = vld [vmem:[%s6] sm:$0x7]
    %v636 = vpack.c.bf16 %v569, %v569
    %v637 = vpack.c.bf16 %v570, %v570
    %v639 = vlaneseq
    %v640 = vshrl.u32 %v639, 7
    %v641 = vsub.s32 0, %v640
    %v642 = vrot.slane %v635, %v641
    %v643 = vlaneseq
    %v644 = vshrl.u32 %v643, 7
    %v645 = vsub.s32 1, %v644
    %v646 = vrot.slane %v635, %v645
    %v647 = vlaneseq
    %v648 = vshrl.u32 %v647, 7
    %v649 = vsub.s32 2, %v648
    %v650 = vrot.slane %v635, %v649
    %v718 = vunpack.c.l.b16 %v571
    %v719 = vunpack.c.h.b16 %v571
    %v720 = vunpack.c.l.b16 %v572
    %v721 = vunpack.c.l.b16 %v573
    %v722 = vunpack.c.h.b16 %v573
    %v723 = vunpack.c.l.b16 %v574
    %v724 = vunpack.c.l.b16 %v575
    %v725 = vunpack.c.h.b16 %v575
    %v726 = vunpack.c.l.b16 %v576
    %v727 = vunpack.c.l.b16 %v577
    %v728 = vunpack.c.h.b16 %v577
    %v729 = vunpack.c.l.b16 %v578
    %v730 = vunpack.c.l.b16 %v579
    %v731 = vunpack.c.h.b16 %v579
    %v732 = vunpack.c.l.b16 %v580
    %v733 = vunpack.c.l.b16 %v581
    %v734 = vunpack.c.h.b16 %v581
    %v735 = vunpack.c.l.b16 %v582
    %v736 = vunpack.c.l.b16 %v583
    %v737 = vunpack.c.h.b16 %v583
    %v738 = vunpack.c.l.b16 %v584
    %v739 = vunpack.c.l.b16 %v585
    %v740 = vunpack.c.h.b16 %v585
    %v741 = vunpack.c.l.b16 %v586
    %v742 = vunpack.c.l.b16 %v587
    %v743 = vunpack.c.h.b16 %v587
    %v744 = vunpack.c.l.b16 %v588
    %v745 = vunpack.c.l.b16 %v589
    %v746 = vunpack.c.h.b16 %v589
    %v747 = vunpack.c.l.b16 %v590
    %v748 = vunpack.c.l.b16 %v591
    %v749 = vunpack.c.h.b16 %v591
    %v750 = vunpack.c.l.b16 %v592
    %v751 = vunpack.c.l.b16 %v593
    %v752 = vunpack.c.h.b16 %v593
    %v753 = vunpack.c.l.b16 %v594
    %v754 = vunpack.c.l.b16 %v595
    %v755 = vunpack.c.h.b16 %v595
    %v756 = vunpack.c.l.b16 %v596
    %v757 = vunpack.c.l.b16 %v597
    %v758 = vunpack.c.h.b16 %v597
    %v759 = vunpack.c.l.b16 %v598
    %v760 = vunpack.c.l.b16 %v599
    %v761 = vunpack.c.h.b16 %v599
    %v762 = vunpack.c.l.b16 %v600
    %v763 = vunpack.c.l.b16 %v601
    %v764 = vunpack.c.h.b16 %v601
    %v765 = vunpack.c.l.b16 %v602
    %v766 = vunpack.c.l.b16 %v603
    %v767 = vunpack.c.h.b16 %v603
    %v768 = vunpack.c.l.b16 %v604
    %v769 = vunpack.c.l.b16 %v605
    %v770 = vunpack.c.h.b16 %v605
    %v771 = vunpack.c.l.b16 %v606
    %v772 = vunpack.c.l.b16 %v607
    %v773 = vunpack.c.h.b16 %v607
    %v774 = vunpack.c.l.b16 %v608
    %v775 = vunpack.c.l.b16 %v609
    %v776 = vunpack.c.h.b16 %v609
    %v777 = vunpack.c.l.b16 %v610
    %v778 = vunpack.c.l.b16 %v611
    %v779 = vunpack.c.h.b16 %v611
    %v780 = vunpack.c.l.b16 %v612
    %v781 = vunpack.c.l.b16 %v613
    %v782 = vunpack.c.h.b16 %v613
    %v783 = vunpack.c.l.b16 %v614
    %v784 = vunpack.c.l.b16 %v615
    %v785 = vunpack.c.h.b16 %v615
    %v786 = vunpack.c.l.b16 %v616
    %v787 = vunpack.c.l.b16 %v617
    %v788 = vunpack.c.h.b16 %v617
    %v789 = vunpack.c.l.b16 %v618
    %v790 = vunpack.c.l.b16 %v619
    %v791 = vunpack.c.h.b16 %v619
    %v792 = vunpack.c.l.b16 %v620
    %v793 = vunpack.c.l.b16 %v621
    %v794 = vunpack.c.h.b16 %v621
    %v795 = vunpack.c.l.b16 %v622
    %v796 = vunpack.c.l.b16 %v623
    %v797 = vunpack.c.h.b16 %v623
    %v798 = vunpack.c.l.b16 %v624
    %v799 = vunpack.c.l.b16 %v625
    %v800 = vunpack.c.h.b16 %v625
    %v801 = vunpack.c.l.b16 %v626
    %v802 = vunpack.c.l.b16 %v627
    %v803 = vunpack.c.h.b16 %v627
    %v804 = vunpack.c.l.b16 %v628
    %v805 = vunpack.c.l.b16 %v629
    %v806 = vunpack.c.h.b16 %v629
    %v807 = vunpack.c.l.b16 %v630
    %v808 = vunpack.c.l.b16 %v631
    %v809 = vunpack.c.h.b16 %v631
    %v810 = vunpack.c.l.b16 %v632
    %v811 = vunpack.c.l.b16 %v633
    %v812 = vunpack.c.h.b16 %v633
    %v813 = vunpack.c.l.b16 %v634
    %v814 = vpack.c.b16 %v721, %v718
    %v815 = vpack.c.b16 %v722, %v719
    %v816 = vpack.c.b16 %v723, %v720
    %v817 = vpack.c.b16 %v727, %v724
    %v818 = vpack.c.b16 %v728, %v725
    %v819 = vpack.c.b16 %v729, %v726
    %v820 = vpack.c.b16 %v733, %v730
    %v821 = vpack.c.b16 %v734, %v731
    %v822 = vpack.c.b16 %v735, %v732
    %v823 = vpack.c.b16 %v739, %v736
    %v824 = vpack.c.b16 %v740, %v737
    %v825 = vpack.c.b16 %v741, %v738
    %v826 = vpack.c.b16 %v745, %v742
    %v827 = vpack.c.b16 %v746, %v743
    %v828 = vpack.c.b16 %v747, %v744
    %v829 = vpack.c.b16 %v751, %v748
    %v830 = vpack.c.b16 %v752, %v749
    %v831 = vpack.c.b16 %v753, %v750
    %v832 = vpack.c.b16 %v757, %v754
    %v833 = vpack.c.b16 %v758, %v755
    %v834 = vpack.c.b16 %v759, %v756
    %v835 = vpack.c.b16 %v763, %v760
    %v836 = vpack.c.b16 %v764, %v761
    %v837 = vpack.c.b16 %v765, %v762
    %v838 = vpack.c.b16 %v769, %v766
    %v839 = vpack.c.b16 %v770, %v767
    %v840 = vpack.c.b16 %v771, %v768
    %v841 = vpack.c.b16 %v775, %v772
    %v842 = vpack.c.b16 %v776, %v773
    %v843 = vpack.c.b16 %v777, %v774
    %v844 = vpack.c.b16 %v781, %v778
    %v845 = vpack.c.b16 %v782, %v779
    %v846 = vpack.c.b16 %v783, %v780
    %v847 = vpack.c.b16 %v787, %v784
    %v848 = vpack.c.b16 %v788, %v785
    %v849 = vpack.c.b16 %v789, %v786
    %v850 = vpack.c.b16 %v793, %v790
    %v851 = vpack.c.b16 %v794, %v791
    %v852 = vpack.c.b16 %v795, %v792
    %v853 = vpack.c.b16 %v799, %v796
    %v854 = vpack.c.b16 %v800, %v797
    %v855 = vpack.c.b16 %v801, %v798
    %v856 = vpack.c.b16 %v805, %v802
    %v857 = vpack.c.b16 %v806, %v803
    %v858 = vpack.c.b16 %v807, %v804
    %v859 = vpack.c.b16 %v811, %v808
    %v860 = vpack.c.b16 %v812, %v809
    %v861 = vpack.c.b16 %v813, %v810
    %910 = vmatprep.subr.bf16.mxu0 %v815
    %911 = vmatpush1.bf16.msra.mxu0 %v814
    %912 = vmatprep.subr.bf16.mxu0 %v818
    %913 = vmatpush1.bf16.msra.mxu0 %v817
    %914 = vmatprep.subr.bf16.mxu0 %v821
    %915 = vmatpush1.bf16.msra.mxu0 %v820
    %916 = vmatprep.subr.bf16.mxu0 %v824
    %917 = vmatpush1.bf16.msra.mxu0 %v823
    %918 = vmatprep.subr.bf16.mxu0 %v827
    %919 = vmatpush1.bf16.msra.mxu0 %v826
    %920 = vmatprep.subr.bf16.mxu0 %v830
    %921 = vmatpush1.bf16.msra.mxu0 %v829
    %922 = vmatprep.subr.bf16.mxu0 %v833
    %923 = vmatpush1.bf16.msra.mxu0 %v832
    %924 = vmatprep.subr.bf16.mxu0 %v836
    %925 = vmatpush1.bf16.msra.mxu0 %v835
    %926 = vmatprep.subr.bf16.mxu0 %v839
    %927 = vmatpush1.bf16.msra.mxu0 %v838
    %928 = vmatprep.subr.bf16.mxu0 %v842
    %929 = vmatpush1.bf16.msra.mxu0 %v841
    %930 = vmatprep.subr.bf16.mxu0 %v845
    %931 = vmatpush1.bf16.msra.mxu0 %v844
    %932 = vmatprep.subr.bf16.mxu0 %v848
    %933 = vmatpush1.bf16.msra.mxu0 %v847
    %934 = vmatprep.subr.bf16.mxu0 %v851
    %935 = vmatpush1.bf16.msra.mxu0 %v850
    %936 = vmatprep.subr.bf16.mxu0 %v854
    %937 = vmatpush1.bf16.msra.mxu0 %v853
    %938 = vmatprep.subr.bf16.mxu0 %v857
    %939 = vmatpush1.bf16.msra.mxu0 %v856
    %940 = vmatprep.subr.bf16.mxu0 %v860
    %941 = vmatpush1.bf16.msra.mxu0 %v859
    %942 = vmatprep.mubr.bf16.mxu0 %v637
    %943 = vmatmul.mubr.bf16.gmra.mrb[0].mxu0 %v636
    %v944 = vpop.f32.mrb[0].mxu0
    %v945 = vadd.f32 %v642, %v944
    %v946 = vpop.f32.mrb[0].mxu0
    %v947 = vadd.f32 %v646, %v946
    %v948 = vpop.f32.mrb[0].mxu0
    %v949 = vpop.f32.mrb[0].mxu0
    %950 = vdwg.mxu0
    %951 = vmatprep.subr.bf16.mxu0 0
    %952 = vmatpush1.bf16.msra.mxu0 %v816
    %953 = vmatprep.subr.bf16.mxu0 0
    %954 = vmatpush1.bf16.msra.mxu0 %v819
    %955 = vmatprep.subr.bf16.mxu0 0
    %956 = vmatpush1.bf16.msra.mxu0 %v822
    %957 = vmatprep.subr.bf16.mxu0 0
    %958 = vmatpush1.bf16.msra.mxu0 %v825
    %959 = vmatprep.subr.bf16.mxu0 0
    %960 = vmatpush1.bf16.msra.mxu0 %v828
    %961 = vmatprep.subr.bf16.mxu0 0
    %962 = vmatpush1.bf16.msra.mxu0 %v831
    %963 = vmatprep.subr.bf16.mxu0 0
    %964 = vmatpush1.bf16.msra.mxu0 %v834
    %965 = vmatprep.subr.bf16.mxu0 0
    %966 = vmatpush1.bf16.msra.mxu0 %v837
    %967 = vmatprep.subr.bf16.mxu0 0
    %968 = vmatpush1.bf16.msra.mxu0 %v840
    %969 = vmatprep.subr.bf16.mxu0 0
    %970 = vmatpush1.bf16.msra.mxu0 %v843
    %971 = vmatprep.subr.bf16.mxu0 0
    %972 = vmatpush1.bf16.msra.mxu0 %v846
    %973 = vmatprep.subr.bf16.mxu0 0
    %974 = vmatpush1.bf16.msra.mxu0 %v849
    %975 = vmatprep.subr.bf16.mxu0 0
    %976 = vmatpush1.bf16.msra.mxu0 %v852
    %977 = vmatprep.subr.bf16.mxu0 0
    %978 = vmatpush1.bf16.msra.mxu0 %v855
    %979 = vmatprep.subr.bf16.mxu0 0
    %980 = vmatpush1.bf16.msra.mxu0 %v858
    %981 = vmatprep.subr.bf16.mxu0 0
    %982 = vmatpush1.bf16.msra.mxu0 %v861
    %983 = vmatprep.mubr.bf16.mxu0 %v637
    %984 = vmatmul.mubr.bf16.gmra.mrb[0].mxu0 %v636
    %v985 = vpop.f32.mrb[0].mxu0
    %v986 = vadd.f32 %v650, %v985
    %v987 = vpop.f32.mrb[0].mxu0
    %v988 = vpop.f32.mrb[0].mxu0
    %v989 = vpop.f32.mrb[0].mxu0
    %990 = vdwg.mxu0
    %991 = vst [vmem:[#allocation10] sm:$0xff] %v945
    %992 = vst [vmem:[#allocation10 + $0x8] sm:$0xff] %v947
    %993 = vst [vmem:[#allocation10 + $0x10] sm:$0xff] %v986
    // Predicated region
    $region46: #{_fused_decoder.1} parent=1 // pred_check
      _
    $region47: #{_fused_decoder.1} parent=1 // pred_check_branch
      %995 = sbr.rel (0) target = $region49
    $region48: #{_fused_decoder.1} parent=1 // pred_region
      %s997 = ssub.s32 384, 384
      %998 = vsyncadd [#allocation4], %s997
      %s1000 = sshll.u32 [#allocation10], 4
      %s1001 = int_to_ptr.vmem [resolvable:$true] %s1000
      %1003 = dma.vmem_to_hbm [thread:$0]  %s1001, 384, %s7, [#allocation4]
    $region49: #{_fused_decoder.1} parent=1 // pred_fallthru
      _
    // Predicated region
    $region50: #{_fused_decoder.1} parent=1 // pred_check
      _
    $region51: #{_fused_decoder.1} parent=1 // pred_check_branch
      %1005 = sbr.rel (0) target = $region53
    $region52: #{_fused_decoder.1} parent=1 // pred_region
      %1006 = dma.done [#allocation4], 384
    $region53: #{_fused_decoder.1} parent=1 // pred_fallthru
      _
    %1007 = vsyncpa [#allocation3], 1
    %1008 = vsyncpa [#allocation6], 1
    %1009 = vsyncpa [#allocation9], 1
    %1010 = vsyncpa [#allocation4], 1

</llo_original>
